<compile_context>
chip_gen: v7x
topology: tpu7x:2x2x1
jax: 0.10.0
libtpu: 0.0.40
codegen_flags: <defaults>
</compile_context>

<pallas_src>
import functools

import jax
import jax.numpy as jnp
from jax.experimental import pallas as pl
from jax.experimental.pallas import tpu as pltpu


_VMEM_LIMIT_BYTES = 32 * 1024 * 1024        # safe on v5e/v6e (128 MiB) and v7x (64 MiB)
_TILE_VMEM_BUDGET = 12 * 1024 * 1024        # working-set budget used to size row tiles


def _sublane_pack(dtype) -> int:
    """Rows per packed vreg: 8 for 4-byte, 16 for 2-byte, 32 for 1-byte dtypes."""
    return max(8, 32 // jnp.dtype(dtype).itemsize)


def _pick_row_tile(n_rows, n_cols, dtype, n_streams, max_rows=1024):
    """Largest row tile (multiple of the sublane pack) whose double-buffered
    working set across `n_streams` arrays stays under the VMEM budget."""
    pack = _sublane_pack(dtype)
    if n_rows <= pack:
        return n_rows
    itemsize = jnp.dtype(dtype).itemsize
    bytes_per_row = max(1, n_cols * itemsize * n_streams * 2)   # x2: double buffering
    cap = _TILE_VMEM_BUDGET // bytes_per_row
    cap = min(cap, max_rows, n_rows)
    tile = max(pack, (cap // pack) * pack)
    return min(tile, n_rows)


def _lane_dense_shape(n_rows, n_cols):
    """Reshape target for pure-elementwise kernels: last dim a large multiple of 128."""
    total = n_rows * n_cols
    for w in (8192, 4096, 2048, 1024, 512, 256, 128):
        if total % w == 0:
            return (total // w, w)
    return (n_rows, n_cols)


# ---------------------------------------------------------------------------
# Kernel 1: LayerNorm over the last dim (eps matches nn.LayerNorm default).
# ---------------------------------------------------------------------------
def layernorm_kernel(x_ref, g_ref, b_ref, o_ref, *, eps):
    x = x_ref[...].astype(jnp.float32)                    # (TR, C)
    inv_n = 1.0 / x.shape[-1]
    s = jnp.sum(x, axis=-1, keepdims=True)                # single pass: sum + sumsq
    sq = jnp.sum(x * x, axis=-1, keepdims=True)
    mean = s * inv_n
    var = jnp.maximum(sq * inv_n - mean * mean, 0.0)      # population variance
    inv = jax.lax.rsqrt(var + eps)
    g = g_ref[...].astype(jnp.float32)
    b = b_ref[...].astype(jnp.float32)
    o_ref[...] = ((x - mean) * inv * g + b).astype(o_ref.dtype)


# ---------------------------------------------------------------------------
# Kernel 2a: residual add + inverted dropout (training semantics of nn.Dropout).
# Random bits arrive as uint32; drop iff bits < p * 2^32.
# ---------------------------------------------------------------------------
def residual_dropout_kernel(x_ref, s_ref, bits_ref, o_ref, *, scale, threshold):
    acc_dt = jnp.float32 if jnp.dtype(o_ref.dtype).itemsize < 4 else o_ref.dtype
    x = x_ref[...].astype(acc_dt)
    s = s_ref[...].astype(acc_dt)
    keep = bits_ref[...] >= jnp.uint32(threshold)
    dropped = jnp.where(keep, s * scale, 0.0)
    o_ref[...] = (x + dropped).astype(o_ref.dtype)


# ---------------------------------------------------------------------------
# Kernel 2b: plain residual add (eval mode / p == 0).
# ---------------------------------------------------------------------------
def residual_kernel(x_ref, s_ref, o_ref):
    acc_dt = jnp.float32 if jnp.dtype(o_ref.dtype).itemsize < 4 else o_ref.dtype
    o_ref[...] = (x_ref[...].astype(acc_dt) + s_ref[...].astype(acc_dt)).astype(o_ref.dtype)


# ---------------------------------------------------------------------------
# Wrappers
# ---------------------------------------------------------------------------
def layer_norm(x2d, gamma, beta, *, eps=1e-5):
    R, C = x2d.shape
    row_tile = _pick_row_tile(R, C, x2d.dtype, n_streams=2)
    grid = (pl.cdiv(R, row_tile),)
    return pl.pallas_call(
        functools.partial(layernorm_kernel, eps=eps),
        out_shape=jax.ShapeDtypeStruct((R, C), x2d.dtype),
        grid=grid,
        in_specs=[pl.BlockSpec((row_tile, C), lambda i: (i, 0)),
                  pl.BlockSpec((1, C), lambda i: (0, 0)),
                  pl.BlockSpec((1, C), lambda i: (0, 0))],
        out_specs=pl.BlockSpec((row_tile, C), lambda i: (i, 0)),
        compiler_params=pltpu.CompilerParams(
            dimension_semantics=("parallel",),
            vmem_limit_bytes=_VMEM_LIMIT_BYTES),
    )(x2d, gamma.reshape(1, C), beta.reshape(1, C))


def residual_add_dropout(x2d, sub2d, *, p, training, rng_key):
    R, C = x2d.shape
    out_dtype = x2d.dtype
    # Pure elementwise -> lane-dense reshape (unmasked vector stores).
    Rd, Cd = _lane_dense_shape(R, C)
    xf = x2d.reshape(Rd, Cd)
    sf = sub2d.reshape(Rd, Cd)

    use_dropout = bool(training) and float(p) > 0.0
    n_streams = 4 if use_dropout else 3
    row_tile = _pick_row_tile(Rd, Cd, out_dtype, n_streams=n_streams)
    grid = (pl.cdiv(Rd, row_tile),)

    def blk():
        return pl.BlockSpec((row_tile, Cd), lambda i: (i, 0))

    cparams = pltpu.CompilerParams(dimension_semantics=("parallel",),
                                   vmem_limit_bytes=_VMEM_LIMIT_BYTES)

    if use_dropout:
        threshold = min(int(round(float(p) * 2.0 ** 32)), 2 ** 32 - 1)
        scale = 1.0 / (1.0 - float(p))
        bits = jax.random.bits(rng_key, (Rd, Cd), dtype=jnp.uint32)
        out = pl.pallas_call(
            functools.partial(residual_dropout_kernel, scale=scale, threshold=threshold),
            out_shape=jax.ShapeDtypeStruct((Rd, Cd), out_dtype),
            grid=grid,
            in_specs=[blk(), blk(), blk()],
            out_specs=blk(),
            compiler_params=cparams,
        )(xf, sf, bits)
    else:
        out = pl.pallas_call(
            residual_kernel,
            out_shape=jax.ShapeDtypeStruct((Rd, Cd), out_dtype),
            grid=grid,
            in_specs=[blk(), blk()],
            out_specs=blk(),
            compiler_params=cparams,
        )(xf, sf)
    return out.reshape(R, C)


def sublayer_connection(x, gamma, beta, sublayer_fn, *, p=0.1, training=True,
                        rng_key=None, eps=1e-5):
    """x + dropout(sublayer(LayerNorm(x))), normalizing over the last axis."""
    orig_shape = x.shape
    C = orig_shape[-1]
    x2d = x.reshape(-1, C)

    norm = layer_norm(x2d, gamma, beta, eps=eps)

    # The sublayer is an arbitrary user callable -> plain-JAX glue between kernels.
    # TODO(synk): if the sublayer is a known matmul, fuse this residual+dropout
    # tail into its epilogue to save one full (R, C) HBM round-trip.
    sub = sublayer_fn(norm.reshape(orig_shape)).reshape(-1, C)

    if rng_key is None:
        rng_key = jax.random.PRNGKey(0)
    out = residual_add_dropout(x2d, sub, p=p, training=training, rng_key=rng_key)
    return out.reshape(orig_shape)


if __name__ == "__main__":
    batch, seq, hidden = 2, 8, 32
    dropout_p = 0.1

    key = jax.random.PRNGKey(0)
    kx, kw, kb, kdrop = jax.random.split(key, 4)

    x = jax.random.normal(kx, (batch, seq, hidden), dtype=jnp.float32)

    # LayerNorm params (nn.LayerNorm init: weight=1, bias=0)
    gamma = jnp.ones((hidden,), dtype=jnp.float32)
    beta = jnp.zeros((hidden,), dtype=jnp.float32)

    # Example sublayer: a small linear layer (deterministic init)
    w = jax.random.normal(kw, (hidden, hidden), dtype=jnp.float32) * 0.02
    b = jax.random.normal(kb, (hidden,), dtype=jnp.float32) * 0.02
    sublayer_fn = lambda h: jnp.dot(h, w) + b

    x2d = x.reshape(batch * seq, hidden)

    # --- eval-mode correctness vs pure-JAX reference (dropout disabled) ---
    out_eval = sublayer_connection(x, gamma, beta, sublayer_fn,
                                   p=dropout_p, training=False)
    mean = jnp.mean(x2d, axis=-1, keepdims=True)
    var = jnp.mean((x2d - mean) ** 2, axis=-1, keepdims=True)
    norm_ref = (x2d - mean) * jax.lax.rsqrt(var + 1e-5) * gamma[None, :] + beta[None, :]
    ref_eval = x2d + sublayer_fn(norm_ref)
    assert jnp.allclose(out_eval.reshape(-1, hidden), ref_eval, atol=1e-4, rtol=1e-4)

    # --- training-mode correctness (inverted dropout via integer threshold) ---
    out_train = sublayer_connection(x, gamma, beta, sublayer_fn,
                                    p=dropout_p, training=True, rng_key=kdrop)
    jax.block_until_ready(out_train)

    R, C = x2d.shape
    Rd, Cd = _lane_dense_shape(R, C)
    bits = jax.random.bits(kdrop, (Rd, Cd), dtype=jnp.uint32).reshape(R, C)
    threshold = min(int(round(dropout_p * 2.0 ** 32)), 2 ** 32 - 1)
    keep = bits >= jnp.uint32(threshold)
    ref_train = x2d + jnp.where(keep, sublayer_fn(norm_ref) / (1.0 - dropout_p), 0.0)
    assert jnp.allclose(out_train.reshape(-1, hidden), ref_train, atol=1e-4, rtol=1e-4)
    assert bool(jnp.all(jnp.isfinite(out_train)))

    print("KERNEL_OK")
</pallas_src>

<mosaic_0001>
module attributes {stable_mosaic.version = 11 : i64} {
  func.func @layernorm_kernel(%arg0: i32, %arg1: memref<16x32xf32, #tpu.memory_space<vmem>>, %arg2: memref<1x32xf32, #tpu.memory_space<vmem>>, %arg3: memref<1x32xf32, #tpu.memory_space<vmem>>, %arg4: memref<16x32xf32, #tpu.memory_space<vmem>>) attributes {dimension_semantics = [#tpu.dimension_semantics<parallel>], iteration_bounds = array<i64: 1>, scalar_prefetch = 0 : i64, scratch_operands = 0 : i64, tpu.core_type = #tpu.core_type<tc>, window_params = [{transform_indices = @transform_0, window_bounds = array<i64: 16, 32>}, {pipeline_mode = #tpu.pipeline_mode<synchronous>, transform_indices = @transform_1, window_bounds = array<i64: 1, 32>}, {pipeline_mode = #tpu.pipeline_mode<synchronous>, transform_indices = @transform_2, window_bounds = array<i64: 1, 32>}, {transform_indices = @transform_3, window_bounds = array<i64: 16, 32>}]} {
    %c0 = arith.constant 0 : index
    %c0_0 = arith.constant 0 : index
    %0 = vector.load %arg1[%c0, %c0_0] : memref<16x32xf32, #tpu.memory_space<vmem>>, vector<16x32xf32>
    %cst = arith.constant dense<0.000000e+00> : vector<16xf32>
    %1 = vector.multi_reduction <add>, %0, %cst [1] : vector<16x32xf32> to vector<16xf32>
    %2 = vector.shape_cast %1 : vector<16xf32> to vector<16x1xf32>
    %3 = arith.mulf %0, %0 : vector<16x32xf32>
    %cst_1 = arith.constant dense<0.000000e+00> : vector<16xf32>
    %4 = vector.multi_reduction <add>, %3, %cst_1 [1] : vector<16x32xf32> to vector<16xf32>
    %5 = vector.shape_cast %4 : vector<16xf32> to vector<16x1xf32>
    %cst_2 = arith.constant 3.125000e-02 : f32
    %6 = vector.broadcast %cst_2 : f32 to vector<16x1xf32>
    %7 = arith.mulf %2, %6 : vector<16x1xf32>
    %cst_3 = arith.constant 3.125000e-02 : f32
    %8 = vector.broadcast %cst_3 : f32 to vector<16x1xf32>
    %9 = arith.mulf %5, %8 : vector<16x1xf32>
    %10 = arith.mulf %7, %7 : vector<16x1xf32>
    %11 = arith.subf %9, %10 : vector<16x1xf32>
    %cst_4 = arith.constant 0.000000e+00 : f32
    %12 = vector.broadcast %cst_4 : f32 to vector<16x1xf32>
    %13 = arith.maximumf %11, %12 : vector<16x1xf32>
    %cst_5 = arith.constant 9.99999974E-6 : f32
    %14 = vector.broadcast %cst_5 : f32 to vector<16x1xf32>
    %15 = arith.addf %13, %14 : vector<16x1xf32>
    %16 = math.rsqrt %15 : vector<16x1xf32>
    %c0_6 = arith.constant 0 : index
    %c0_7 = arith.constant 0 : index
    %17 = vector.load %arg2[%c0_6, %c0_7] : memref<1x32xf32, #tpu.memory_space<vmem>>, vector<1x32xf32>
    %c0_8 = arith.constant 0 : index
    %c0_9 = arith.constant 0 : index
    %18 = vector.load %arg3[%c0_8, %c0_9] : memref<1x32xf32, #tpu.memory_space<vmem>>, vector<1x32xf32>
    %19 = vector.broadcast %7 : vector<16x1xf32> to vector<16x32xf32>
    %20 = arith.subf %0, %19 : vector<16x32xf32>
    %21 = vector.broadcast %16 : vector<16x1xf32> to vector<16x32xf32>
    %22 = arith.mulf %20, %21 : vector<16x32xf32>
    %23 = vector.broadcast %17 : vector<1x32xf32> to vector<16x32xf32>
    %24 = arith.mulf %22, %23 : vector<16x32xf32>
    %25 = vector.broadcast %18 : vector<1x32xf32> to vector<16x32xf32>
    %26 = arith.addf %24, %25 : vector<16x32xf32>
    %c0_10 = arith.constant 0 : index
    %c0_11 = arith.constant 0 : index
    %27 = vector.load %arg4[%c0_10, %c0_11] : memref<16x32xf32, #tpu.memory_space<vmem>>, vector<16x32xf32>
    tpu.vector_store %arg4[%c0_10, %c0_11], %26 {strides = array<i32>} : memref<16x32xf32, #tpu.memory_space<vmem>>, vector<16x32xf32>,
    return
  }
  func.func @transform_0(%arg0: i32) -> (i32, i32) {
    %c0_i32 = arith.constant 0 : i32
    %c0_i32_0 = arith.constant 0 : i32
    return %arg0, %c0_i32 : i32, i32
  }
  func.func @transform_1(%arg0: i32) -> (i32, i32) {
    %c0_i32 = arith.constant 0 : i32
    %c0_i32_0 = arith.constant 0 : i32
    %c0_i32_1 = arith.constant 0 : i32
    return %c0_i32, %c0_i32_0 : i32, i32
  }
  func.func @transform_2(%arg0: i32) -> (i32, i32) {
    %c0_i32 = arith.constant 0 : i32
    %c0_i32_0 = arith.constant 0 : i32
    %c0_i32_1 = arith.constant 0 : i32
    return %c0_i32, %c0_i32_0 : i32, i32
  }
  func.func @transform_3(%arg0: i32) -> (i32, i32) {
    %c0_i32 = arith.constant 0 : i32
    %c0_i32_0 = arith.constant 0 : i32
    return %arg0, %c0_i32 : i32, i32
  }
}

</mosaic_0001>

<llo_original>
// kernel: tpu_custom_call.1
$region0: #{tpu_custom_call.1}
  #allocation0 [shape = 'u32[]', space=smem, size = 0x4, offset = 0x4, fixed_abs, tag = 'smem constant byte address 0x4 - core index']
  #allocation1 [shape = 'u32[144,128]{1,0:T(1,128)}', space=vmem, size = 0x12000, scoped, tag = 'internal scratch']
  %s0 = inlined_call_operand.hbm [shape: f32[16,32], index: 0, kind: input, shape index: {}]
  %s1 = inlined_call_operand.vmem [shape: f32[1,32], index: 1, kind: input, shape index: {}]
  %s2 = inlined_call_operand.vmem [shape: f32[1,32], index: 2, kind: input, shape index: {}]
  %s3 = inlined_call_operand.hbm [shape: f32[16,32], index: 3, kind: output, shape index: {}]
  %s4 = sld [smem:[#allocation0]]
  $region26: #{tpu_custom_call.1} parent=0
    _
  %s6 = ssub.s32 1, %s4
  %s7 = scalar_select 0, %s6, %s4
  $region1: #{tpu_custom_call.1} parent=0
    #allocation2 [shape = 'u8[8192]{0}', space=vmem, size = 0x2000, scoped, tag = 'input window, operand 0, single buffered']
    #allocation3 [shape = 's32[1]{0}', space=sflag, size = 0x4, scoped, tag = 'scoped memory for tpu_custom_call.1']
    #allocation4 [shape = 's32[1]{0}', space=sflag, size = 0x4, scoped, tag = 'scoped memory for tpu_custom_call.1']
    #allocation5 [shape = 'u8[8192]{0}', space=vmem, size = 0x2000, scoped, tag = 'output window, operand 0, single buffered']
    %8 = vsyncpa [#allocation3], 0
    %9 = vsyncpa [#allocation4], 0
    // Predicated region
    $region2: #{tpu_custom_call.1} parent=1 // pred_check
      _
    $region3: #{tpu_custom_call.1} parent=1 // pred_check_branch
      %11 = sbr.rel (0) target = $region5
    $region4: #{tpu_custom_call.1} parent=1 // pred_region
      %s13 = ssub.s32 256, 256
      %14 = vsyncadd [#allocation3], %s13
      %s15 = sshll.u32 [#allocation2], 4
      %s16 = int_to_ptr.vmem [resolvable:$true] %s15
      %21 = dma.hbm_to_vmem [thread:$0]  %s0, 256, %s16, [#allocation3], 128, 128, 8
    $region5: #{tpu_custom_call.1} parent=1 // pred_fallthru
      _
    // Predicated region
    $region6: #{tpu_custom_call.1} parent=1 // pred_check
      _
    $region7: #{tpu_custom_call.1} parent=1 // pred_check_branch
      %23 = sbr.rel (0) target = $region9
    $region8: #{tpu_custom_call.1} parent=1 // pred_region
      _
    $region9: #{tpu_custom_call.1} parent=1 // pred_fallthru
      _
    // Predicated region
    $region10: #{tpu_custom_call.1} parent=1 // pred_check
      _
    $region11: #{tpu_custom_call.1} parent=1 // pred_check_branch
      %25 = sbr.rel (0) target = $region13
    $region12: #{tpu_custom_call.1} parent=1 // pred_region
      _
    $region13: #{tpu_custom_call.1} parent=1 // pred_fallthru
      _
    // Predicated region
    $region14: #{tpu_custom_call.1} parent=1 // pred_check
      _
    $region15: #{tpu_custom_call.1} parent=1 // pred_check_branch
      %27 = sbr.rel (0) target = $region17
    $region16: #{tpu_custom_call.1} parent=1 // pred_region
      %28 = dma.done [#allocation3], 256
    $region17: #{tpu_custom_call.1} parent=1 // pred_fallthru
      _
    %v29 = vld [vmem:[#allocation2] sm:$0xff]
    %v30 = vld [vmem:[#allocation2 + $0x8] sm:$0xff]
    %vm31 = vcmask 261120
    %v32 = vsel %vm31, %v29, 0.0
    %33 = vadd.xlane.f32.xlu0 %v32
    %v34 = vpop.xlane.xlu0 %33
    %v35 = vsel %vm31, %v30, 0.0
    %36 = vadd.xlane.f32.xlu0 %v35
    %v37 = vpop.xlane.xlu0 %36
    %v38 = vmul.f32 %v29, %v29
    %v39 = vmul.f32 %v30, %v30
    %v40 = vsel %vm31, %v38, 0.0
    %41 = vadd.xlane.f32.xlu0 %v40
    %v42 = vpop.xlane.xlu0 %41
    %v43 = vsel %vm31, %v39, 0.0
    %44 = vadd.xlane.f32.xlu0 %v43
    %v45 = vpop.xlane.xlu0 %44
    %v46 = vmul.f32 %v34, 0.03125
    %v47 = vmul.f32 %v37, 0.03125
    %v48 = vmul.f32 %v42, 0.03125
    %v49 = vmul.f32 %v45, 0.03125
    %v50 = vmul.f32 %v46, %v46
    %v51 = vmul.f32 %v47, %v47
    %v52 = vsub.f32 %v48, %v50
    %v53 = vsub.f32 %v49, %v51
    %v54 = vmax.f32 %v52, 0.0
    %v55 = vmax.f32 %v53, 0.0
    %v56 = vadd.f32 %v54, 1e-05
    %v57 = vadd.f32 %v55, 1e-05
    %v58 = vrsqrt.pop %v56
    %v59 = vrsqrt.pop %v57
    %v60 = vld [vmem:[%s1] sm:$0x1]
    %v61 = vld [vmem:[%s2] sm:$0x1]
    %v62 = vsub.f32 %v29, %v46
    %v63 = vsub.f32 %v30, %v47
    %v64 = vmul.f32 %v62, %v58
    %v65 = vmul.f32 %v63, %v59
    %v67 = vlaneseq
    %v68 = vshrl.u32 %v67, 7
    %v69 = vsub.s32 0, %v68
    %v70 = vrot.slane %v60, %v69
    %v72 = vmul.f32 %v64, %v70
    %v73 = vmul.f32 %v65, %v70
    %v75 = vlaneseq
    %v76 = vshrl.u32 %v75, 7
    %v77 = vsub.s32 0, %v76
    %v78 = vrot.slane %v61, %v77
    %v80 = vadd.f32 %v72, %v78
    %v81 = vadd.f32 %v73, %v78
    %82 = vst.msk [vmem:[#allocation5] sm:$0xff] %vm31, %v80
    %83 = vst.msk [vmem:[#allocation5 + $0x8] sm:$0xff] %vm31, %v81
    // Predicated region
    $region18: #{tpu_custom_call.1} parent=1 // pred_check
      _
    $region19: #{tpu_custom_call.1} parent=1 // pred_check_branch
      %85 = sbr.rel (0) target = $region21
    $region20: #{tpu_custom_call.1} parent=1 // pred_region
      %s87 = ssub.s32 256, 256
      %88 = vsyncadd [#allocation4], %s87
      %s89 = sshll.u32 [#allocation5], 4
      %s90 = int_to_ptr.vmem [resolvable:$true] %s89
      %95 = dma.vmem_to_hbm [thread:$0]  %s90, 256, %s3, [#allocation4], 128, 128, 8
    $region21: #{tpu_custom_call.1} parent=1 // pred_fallthru
      _
    // Predicated region
    $region22: #{tpu_custom_call.1} parent=1 // pred_check
      _
    $region23: #{tpu_custom_call.1} parent=1 // pred_check_branch
      %97 = sbr.rel (0) target = $region25
    $region24: #{tpu_custom_call.1} parent=1 // pred_region
      %98 = dma.done [#allocation4], 256
    $region25: #{tpu_custom_call.1} parent=1 // pred_fallthru
      _
    %99 = vsyncpa [#allocation3], 1
    %100 = vsyncpa [#allocation4], 1

</llo_original>
